<compile_context>
chip_gen: v7x
topology: tpu7x:2x2x1
jax: 0.10.0
libtpu: 0.0.40
codegen_flags: <defaults>
</compile_context>

<pallas_src>
import jax
import jax.numpy as jnp
from jax.experimental import pallas as pl
from jax.experimental.pallas import tpu as pltpu


def _make_kernel(num_features, hidden_dim, lane_pad):
    """Build the kernel closed over static F, H and lane padding."""

    def kernel(x_ref, w_ref, b_ref, o_ref):
        # x_ref: (TB, F)          batch tile of inputs
        # w_ref: (1, FH_pad)      flattened weights  (VMEM-resident)
        # b_ref: (1, FH_pad)      flattened biases   (VMEM-resident)
        # o_ref: (TB, FH_pad)     lane-dense output tile
        x = x_ref[...].astype(jnp.float32)          # (TB, F)
        tb = x.shape[0]

        # Lane-expand x to (TB, F*H): chunk f is x[:, f] broadcast across H
        # lanes.  Pure lane-broadcast + lane-concatenate (VPU/XLU); no MXU,
        # no risky sublane->lane reshape.
        chunks = [
            jnp.broadcast_to(x[:, f:f + 1], (tb, hidden_dim))
            for f in range(num_features)
        ]
        if lane_pad:
            chunks.append(jnp.zeros((tb, lane_pad), dtype=jnp.float32))
        x_exp = jnp.concatenate(chunks, axis=-1)    # (TB, FH_pad)

        # Exact f32 FMA: out[b, f*H + h] = x[b, f] * W[f, h] + B[f, h]
        acc = x_exp * w_ref[...].astype(jnp.float32) + b_ref[...].astype(jnp.float32)
        o_ref[...] = acc.astype(o_ref.dtype)

    return kernel


def _choose_batch_tile(batch, flat_width, out_itemsize,
                       target_out_bytes=8 << 20, min_grid_steps=4):
    """Batch tile giving ~target_out_bytes output slabs, while keeping
    >= min_grid_steps grid steps when the batch permits (v7x: both cores get
    >= 2 steps; pipelining has something to overlap)."""
    tb = max(1, target_out_bytes // max(1, flat_width * out_itemsize))
    if batch >= 8 * min_grid_steps:
        tb = min(tb, pl.cdiv(batch, min_grid_steps))
    if tb >= batch:
        return batch
    # Non-full batch blocks: sublane (second-minor) dim must be a multiple of 8.
    tb = max(8, (tb // 8) * 8)
    return batch if tb >= batch else tb


def independent_feature_linear(x, weight, bias, *, batch_tile=None,
                               out_dtype=None, target_out_bytes=8 << 20):
    """x: (B, F) f32; weight: (F, H) f32 (W[f, h] == linears[f].weight[h, 0]);
    bias: (F, H) f32  ->  (B, F, H) in out_dtype (default: x.dtype)."""
    B, F = x.shape
    F_w, H = weight.shape
    assert F == F_w and bias.shape == (F, H)
    FH = F * H
    out_dtype = jnp.dtype(x.dtype if out_dtype is None else out_dtype)
    out_itemsize = out_dtype.itemsize

    # Pad the flat lane width to a 128 multiple -> unmasked lane-dense stores.
    FH_pad = pl.cdiv(FH, 128) * 128
    lane_pad = FH_pad - FH

    # Flat resident weights/bias (F x smaller than the old block-diagonal fold).
    w_flat = weight.reshape(1, FH).astype(jnp.float32)
    b_flat = bias.reshape(1, FH).astype(jnp.float32)
    if lane_pad:
        w_flat = jnp.pad(w_flat, ((0, 0), (0, lane_pad)))
        b_flat = jnp.pad(b_flat, ((0, 0), (0, lane_pad)))

    if batch_tile is None:
        batch_tile = _choose_batch_tile(B, FH_pad, out_itemsize, target_out_bytes)
    tb = batch_tile
    grid = (pl.cdiv(B, tb),)

    # Explicit VMEM budget: 2x out tile + 2x in tile + 2x (w,b) residents + margin.
    x_itemsize = jnp.dtype(x.dtype).itemsize
    vmem_need = (2 * tb * FH_pad * out_itemsize
                 + 2 * tb * F * x_itemsize
                 + 4 * FH_pad * 4
                 + (2 << 20))
    # At least 24 MiB (covers internal scratch / small cases), at most 48 MiB
    # (safely under v7x's 64 MiB physical VMEM, and fine on v5e/v6e's 128 MiB).
    vmem_limit = int(min(max(vmem_need, 24 << 20), 48 << 20))

    kernel = _make_kernel(F, H, lane_pad)

    out_flat = pl.pallas_call(
        kernel,
        out_shape=jax.ShapeDtypeStruct((B, FH_pad), out_dtype),
        grid=grid,
        in_specs=[
            pl.BlockSpec((tb, F), lambda i: (i, 0)),       # batch-tiled input
            pl.BlockSpec((1, FH_pad), lambda i: (0, 0)),   # resident flat weights
            pl.BlockSpec((1, FH_pad), lambda i: (0, 0)),   # resident flat bias
        ],
        out_specs=pl.BlockSpec((tb, FH_pad), lambda i: (i, 0)),  # lane-dense slab
        compiler_params=pltpu.CompilerParams(
            dimension_semantics=("parallel",),   # megacore / v7x 2-TC split
            vmem_limit_bytes=vmem_limit,
        ),
    )(x, w_flat, b_flat)

    # TODO(synk): when FH % 128 != 0 the slice below is one extra XLA copy of
    # the output; consumers that accept the padded (B, FH_pad) layout can skip it.
    if lane_pad:
        out_flat = out_flat[:, :FH]
    # Free, contiguous reshape back to the module's (B, F, H) output layout.
    return out_flat.reshape(B, F, H)


if __name__ == "__main__":
    # Module hyperparameters (small, consistent with the forward pass).
    batch = 2
    num_features = 4
    hidden_dim = 32

    key = jax.random.PRNGKey(0)
    kx, kw, kb = jax.random.split(key, 3)

    # linears[f].weight has shape (hidden_dim, 1) -> stacked as W[f, :]  (F, H)
    # linears[f].bias   has shape (hidden_dim,)   -> stacked as Bv[f, :] (F, H)
    x = jax.random.normal(kx, (batch, num_features), dtype=jnp.float32)
    W = jax.random.normal(kw, (num_features, hidden_dim), dtype=jnp.float32) * 0.1
    Bv = jax.random.normal(kb, (num_features, hidden_dim), dtype=jnp.float32) * 0.1

    out = independent_feature_linear(x, W, Bv)
    out = jax.block_until_ready(out)

    # Reference check in plain JAX (same math as the PyTorch module).
    ref = x[:, :, None] * W[None, :, :] + Bv[None, :, :]
    assert out.shape == (batch, num_features, hidden_dim)
    err = float(jnp.max(jnp.abs(out - ref)))
    assert jnp.allclose(out, ref, atol=1e-5, rtol=1e-5), f"max abs err = {err}"

    print("KERNEL_OK")
</pallas_src>

<mosaic_0001>
module attributes {stable_mosaic.version = 11 : i64} {
  func.func @kernel(%arg0: i32, %arg1: memref<2x4xf32, #tpu.memory_space<vmem>>, %arg2: memref<1x128xf32, #tpu.memory_space<vmem>>, %arg3: memref<1x128xf32, #tpu.memory_space<vmem>>, %arg4: memref<2x128xf32, #tpu.memory_space<vmem>>) attributes {dimension_semantics = [#tpu.dimension_semantics<parallel>], iteration_bounds = array<i64: 1>, scalar_prefetch = 0 : i64, scratch_operands = 0 : i64, tpu.core_type = #tpu.core_type<tc>, window_params = [{transform_indices = @transform_0, window_bounds = array<i64: 2, 4>}, {pipeline_mode = #tpu.pipeline_mode<synchronous>, transform_indices = @transform_1, window_bounds = array<i64: 1, 128>}, {pipeline_mode = #tpu.pipeline_mode<synchronous>, transform_indices = @transform_2, window_bounds = array<i64: 1, 128>}, {transform_indices = @transform_3, window_bounds = array<i64: 2, 128>}]} {
    %c0 = arith.constant 0 : index
    %c0_0 = arith.constant 0 : index
    %0 = vector.load %arg1[%c0, %c0_0] : memref<2x4xf32, #tpu.memory_space<vmem>>, vector<2x4xf32>
    %1 = vector.extract_strided_slice %0 {offsets = [0, 0], sizes = [2, 1], strides = [1, 1]} : vector<2x4xf32> to vector<2x1xf32>
    %2 = vector.shape_cast %1 : vector<2x1xf32> to vector<2x1xf32>
    %3 = vector.broadcast %2 : vector<2x1xf32> to vector<2x32xf32>
    %4 = vector.extract_strided_slice %0 {offsets = [0, 1], sizes = [2, 1], strides = [1, 1]} : vector<2x4xf32> to vector<2x1xf32>
    %5 = vector.shape_cast %4 : vector<2x1xf32> to vector<2x1xf32>
    %6 = vector.broadcast %5 : vector<2x1xf32> to vector<2x32xf32>
    %7 = vector.extract_strided_slice %0 {offsets = [0, 2], sizes = [2, 1], strides = [1, 1]} : vector<2x4xf32> to vector<2x1xf32>
    %8 = vector.shape_cast %7 : vector<2x1xf32> to vector<2x1xf32>
    %9 = vector.broadcast %8 : vector<2x1xf32> to vector<2x32xf32>
    %10 = vector.extract_strided_slice %0 {offsets = [0, 3], sizes = [2, 1], strides = [1, 1]} : vector<2x4xf32> to vector<2x1xf32>
    %11 = vector.shape_cast %10 : vector<2x1xf32> to vector<2x1xf32>
    %12 = vector.broadcast %11 : vector<2x1xf32> to vector<2x32xf32>
    %13 = tpu.concatenate %3, %6, %9, %12 in 1 : vector<2x32xf32>, vector<2x32xf32>, vector<2x32xf32>, vector<2x32xf32> -> vector<2x128xf32>
    %c0_1 = arith.constant 0 : index
    %c0_2 = arith.constant 0 : index
    %14 = vector.load %arg2[%c0_1, %c0_2] : memref<1x128xf32, #tpu.memory_space<vmem>>, vector<1x128xf32>
    %15 = vector.broadcast %14 : vector<1x128xf32> to vector<2x128xf32>
    %16 = arith.mulf %13, %15 : vector<2x128xf32>
    %c0_3 = arith.constant 0 : index
    %c0_4 = arith.constant 0 : index
    %17 = vector.load %arg3[%c0_3, %c0_4] : memref<1x128xf32, #tpu.memory_space<vmem>>, vector<1x128xf32>
    %18 = vector.broadcast %17 : vector<1x128xf32> to vector<2x128xf32>
    %19 = arith.addf %16, %18 : vector<2x128xf32>
    %c0_5 = arith.constant 0 : index
    %c0_6 = arith.constant 0 : index
    %20 = vector.load %arg4[%c0_5, %c0_6] : memref<2x128xf32, #tpu.memory_space<vmem>>, vector<2x128xf32>
    tpu.vector_store %arg4[%c0_5, %c0_6], %19 {strides = array<i32>} : memref<2x128xf32, #tpu.memory_space<vmem>>, vector<2x128xf32>,
    return
  }
  func.func @transform_0(%arg0: i32) -> (i32, i32) {
    %c0_i32 = arith.constant 0 : i32
    %c0_i32_0 = arith.constant 0 : i32
    return %arg0, %c0_i32 : i32, i32
  }
  func.func @transform_1(%arg0: i32) -> (i32, i32) {
    %c0_i32 = arith.constant 0 : i32
    %c0_i32_0 = arith.constant 0 : i32
    %c0_i32_1 = arith.constant 0 : i32
    return %c0_i32, %c0_i32_0 : i32, i32
  }
  func.func @transform_2(%arg0: i32) -> (i32, i32) {
    %c0_i32 = arith.constant 0 : i32
    %c0_i32_0 = arith.constant 0 : i32
    %c0_i32_1 = arith.constant 0 : i32
    return %c0_i32, %c0_i32_0 : i32, i32
  }
  func.func @transform_3(%arg0: i32) -> (i32, i32) {
    %c0_i32 = arith.constant 0 : i32
    %c0_i32_0 = arith.constant 0 : i32
    return %arg0, %c0_i32 : i32, i32
  }
}

</mosaic_0001>

<llo_original>
// kernel: tpu_custom_call.1
$region0: #{tpu_custom_call.1}
  #allocation0 [shape = 'u32[]', space=smem, size = 0x4, offset = 0x4, fixed_abs, tag = 'smem constant byte address 0x4 - core index']
  #allocation1 [shape = 'u32[144,128]{1,0:T(1,128)}', space=vmem, size = 0x12000, scoped, tag = 'internal scratch']
  %s0 = inlined_call_operand.hbm [shape: f32[2,4], index: 0, kind: input, shape index: {}]
  %s1 = inlined_call_operand.vmem [shape: f32[1,128], index: 1, kind: input, shape index: {}]
  %s2 = inlined_call_operand.vmem [shape: f32[1,128], index: 2, kind: input, shape index: {}]
  %s3 = inlined_call_operand.hbm [shape: f32[2,128], index: 3, kind: output, shape index: {}]
  %s4 = sld [smem:[#allocation0]]
  $region26: #{tpu_custom_call.1} parent=0
    _
  %s6 = ssub.s32 1, %s4
  %s7 = scalar_select 0, %s6, %s4
  $region1: #{tpu_custom_call.1} parent=0
    #allocation2 [shape = 'u8[1024]{0}', space=vmem, size = 0x400, scoped, tag = 'input window, operand 0, single buffered']
    #allocation3 [shape = 's32[1]{0}', space=sflag, size = 0x4, scoped, tag = 'scoped memory for tpu_custom_call.1']
    #allocation4 [shape = 's32[1]{0}', space=sflag, size = 0x4, scoped, tag = 'scoped memory for tpu_custom_call.1']
    #allocation5 [shape = 'u8[1024]{0}', space=vmem, size = 0x400, scoped, tag = 'output window, operand 0, single buffered']
    %8 = vsyncpa [#allocation3], 0
    %9 = vsyncpa [#allocation4], 0
    // Predicated region
    $region2: #{tpu_custom_call.1} parent=1 // pred_check
      _
    $region3: #{tpu_custom_call.1} parent=1 // pred_check_branch
      %11 = sbr.rel (0) target = $region5
    $region4: #{tpu_custom_call.1} parent=1 // pred_region
      %s13 = ssub.s32 32, 32
      %14 = vsyncadd [#allocation3], %s13
      %s16 = sshll.u32 [#allocation2], 4
      %s17 = int_to_ptr.vmem [resolvable:$true] %s16
      %19 = dma.hbm_to_vmem [thread:$0]  %s0, 32, %s17, [#allocation3]
    $region5: #{tpu_custom_call.1} parent=1 // pred_fallthru
      _
    // Predicated region
    $region6: #{tpu_custom_call.1} parent=1 // pred_check
      _
    $region7: #{tpu_custom_call.1} parent=1 // pred_check_branch
      %21 = sbr.rel (0) target = $region9
    $region8: #{tpu_custom_call.1} parent=1 // pred_region
      _
    $region9: #{tpu_custom_call.1} parent=1 // pred_fallthru
      _
    // Predicated region
    $region10: #{tpu_custom_call.1} parent=1 // pred_check
      _
    $region11: #{tpu_custom_call.1} parent=1 // pred_check_branch
      %23 = sbr.rel (0) target = $region13
    $region12: #{tpu_custom_call.1} parent=1 // pred_region
      _
    $region13: #{tpu_custom_call.1} parent=1 // pred_fallthru
      _
    // Predicated region
    $region14: #{tpu_custom_call.1} parent=1 // pred_check
      _
    $region15: #{tpu_custom_call.1} parent=1 // pred_check_branch
      %25 = sbr.rel (0) target = $region17
    $region16: #{tpu_custom_call.1} parent=1 // pred_region
      %26 = dma.done [#allocation3], 32
    $region17: #{tpu_custom_call.1} parent=1 // pred_fallthru
      _
    %v27 = vld [vmem:[#allocation2] sm:$0x3]
    %29 = vset.pattern.permute.xlu0 0
    %30 = vperm.xlu0 %29, %v27
    %v31 = vpop.permute.xlu0 %30
    %33 = vset.pattern.permute.xlu0 1
    %34 = vperm.xlu0 %33, %v27
    %v35 = vpop.permute.xlu0 %34
    %37 = vset.pattern.permute.xlu0 2
    %38 = vperm.xlu0 %37, %v27
    %v39 = vpop.permute.xlu0 %38
    %41 = vset.pattern.permute.xlu0 3
    %42 = vperm.xlu0 %41, %v27
    %v43 = vpop.permute.xlu0 %42
    %vm45 = vcmask 261120
    %v46 = vsel %vm45, %v31, %v35
    %vm47 = vcmask 523264
    %v48 = vsel %vm47, %v46, %v39
    %vm49 = vcmask 785408
    %v50 = vsel %vm49, %v48, %v43
    %v51 = vld [vmem:[%s1] sm:$0x1]
    %v53 = vlaneseq
    %v54 = vshrl.u32 %v53, 7
    %v55 = vsub.s32 0, %v54
    %v56 = vrot.slane %v51, %v55
    %v58 = vmul.f32 %v50, %v56
    %v59 = vld [vmem:[%s2] sm:$0x1]
    %v61 = vlaneseq
    %v62 = vshrl.u32 %v61, 7
    %v63 = vsub.s32 0, %v62
    %v64 = vrot.slane %v59, %v63
    %v66 = vadd.f32 %v58, %v64
    %67 = vst [vmem:[#allocation5] sm:$0x3] %v66
    // Predicated region
    $region18: #{tpu_custom_call.1} parent=1 // pred_check
      _
    $region19: #{tpu_custom_call.1} parent=1 // pred_check_branch
      %69 = sbr.rel (0) target = $region21
    $region20: #{tpu_custom_call.1} parent=1 // pred_region
      %s71 = ssub.s32 32, 32
      %72 = vsyncadd [#allocation4], %s71
      %s74 = sshll.u32 [#allocation5], 4
      %s75 = int_to_ptr.vmem [resolvable:$true] %s74
      %77 = dma.vmem_to_hbm [thread:$0]  %s75, 32, %s3, [#allocation4]
    $region21: #{tpu_custom_call.1} parent=1 // pred_fallthru
      _
    // Predicated region
    $region22: #{tpu_custom_call.1} parent=1 // pred_check
      _
    $region23: #{tpu_custom_call.1} parent=1 // pred_check_branch
      %79 = sbr.rel (0) target = $region25
    $region24: #{tpu_custom_call.1} parent=1 // pred_region
      %80 = dma.done [#allocation4], 32
    $region25: #{tpu_custom_call.1} parent=1 // pred_fallthru
      _
    %81 = vsyncpa [#allocation3], 1
    %82 = vsyncpa [#allocation4], 1

</llo_original>
